<compile_context>
chip_gen: v5e
topology: v5e:2x2
jax: 0.10.0
libtpu: 0.0.40
codegen_flags: <defaults>
</compile_context>

<pallas_src>
from functools import partial

import jax
import jax.numpy as jnp
from jax.experimental import pallas as pl
from jax.experimental.pallas import tpu as pltpu


def _agg_kernel(x_ref, wq_ref, wkv_ref, wp_ref, bp_ref, o_ref, *, num_heads):
    """One grid step processes TB batch elements.

    x_ref   : (TB, N+1, C) bf16  -- token 0 is the cls token
    wq_ref  : (C, C)       bf16  -- Wq.T with the attention scale pre-folded
    wkv_ref : (C, 2C)      bf16  -- [Wk.T | Wv.T]
    wp_ref  : (C, C)       bf16  -- Wproj.T
    bp_ref  : (1, C)       bf16  -- proj bias
    o_ref   : (TB, N, C)
    """
    TB, N1, C = x_ref.shape
    N = N1 - 1
    H = num_heads
    hd = C // H
    f32 = jnp.float32

    # All cls queries in one small MXU call (scale already folded into Wq).
    cls_tok = x_ref[:, 0, :]                                         # (TB, C) bf16
    q = jnp.dot(cls_tok, wq_ref[...], preferred_element_type=f32)    # (TB, C) f32

    wkv = wkv_ref[...]
    wp = wp_ref[...]
    bias = bp_ref[...]

    # Static per-batch loop keeps every matmul a plain 2-D MXU op and removes
    # the N%8 flatten/unflatten relayouts of the batched formulation.  The one
    # remaining sublane-unaligned slice is x_ref[b, 1:, :] (small, bf16).
    for b in range(TB):
        patches = x_ref[b, 1:, :]                                    # (N, C) bf16
        kv = jnp.dot(patches, wkv, preferred_element_type=f32)       # (N, 2C) f32
        k = kv[:, :C]
        v = kv[:, C:]
        qb = q[b : b + 1, :]                                         # (1, C) f32

        # Logits / softmax in f32.  Sublane-major (N, *) logits: reductions are
        # tiny and this layout feeds the v-weighting broadcast with no transpose.
        if H == 1:
            s = jnp.sum(k * qb, axis=-1, keepdims=True)              # (N, 1) f32
            m = jnp.max(s, axis=0, keepdims=True)
            e = jnp.exp(s - m)
            l = jnp.sum(e, axis=0, keepdims=True)
            attn = e * pl.reciprocal(l, approx=True)                 # (N, 1)
            weighted = v * attn                                      # (N, C) f32
        else:
            # One VPU multiply-reduce for all heads: no per-head M=1 matmuls,
            # no concat / swapaxes relayouts.
            k4 = k.reshape(N, H, hd)
            q4 = qb.reshape(1, H, hd)
            s = jnp.sum(k4 * q4, axis=-1)                            # (N, H) f32
            m = jnp.max(s, axis=0, keepdims=True)
            e = jnp.exp(s - m)
            l = jnp.sum(e, axis=0, keepdims=True)
            attn = e * pl.reciprocal(l, approx=True)                 # (N, H)
            weighted = (v.reshape(N, H, hd) * attn[:, :, None]).reshape(N, C)

        proj = jnp.dot(weighted.astype(wp.dtype), wp,
                       preferred_element_type=f32) + bias            # (N, C) f32
        o_ref[b] = proj.astype(o_ref.dtype)


def _pick_batch_tile(B, N, *, row_target=256, min_steps=2,
                     prefer_even_steps=False, max_tb=8):
    """Batch elements per grid step: enough patch rows per step to keep the MXU
    busy and amortize the ~0.35us grid-step overhead, while keeping enough
    (and, on 2-TC chips, an even number of) grid steps."""
    divisors = [tb for tb in range(1, B + 1) if B % tb == 0 and tb <= max_tb]
    passes = (True, False) if prefer_even_steps else (False,)
    for need_even in passes:
        def ok(tb):
            steps = B // tb
            return steps >= min_steps and (not need_even or steps % 2 == 0)
        for tb in divisors:                       # smallest tile hitting the row target
            if tb * N >= row_target and ok(tb):
                return tb
        for tb in reversed(divisors):             # otherwise the largest valid tile
            if ok(tb):
                return tb
    return divisors[-1]


def _step_vmem_bytes(TB, N1, C, in_bytes, out_bytes, weight_bufs):
    """Conservative per-grid-step VMEM footprint estimate."""
    x_tile = TB * N1 * C * in_bytes * 2             # double-buffered input tile
    o_tile = TB * (N1 - 1) * C * out_bytes * 2      # double-buffered output tile
    weights = (4 * C * C + C) * in_bytes * weight_bufs
    inter = TB * N1 * C * 4 * 6                     # f32 kv / weighted / proj temporaries
    return x_tile + o_tile + weights + inter


def _tpu_generation_defaults():
    try:
        kind = jax.devices()[0].device_kind.lower()
    except Exception:
        kind = ""
    if "v5 lite" in kind or "v5e" in kind or "v5lite" in kind:
        # 4x128x128 MXU: 128 rows already fill it; keep >=3 steps so the DMA
        # pipeline stays busy; 128 MiB physical VMEM.
        return dict(row_target=128, min_steps=3, prefer_even_steps=False,
                    vmem_budget=100 << 20)
    if "v7" in kind or "tpu7" in kind:
        # 2 TensorCores share the grid -> prefer an even step count;
        # 64 MiB physical VMEM per core.
        return dict(row_target=256, min_steps=2, prefer_even_steps=True,
                    vmem_budget=48 << 20)
    # v6e / v4 / unknown.
    return dict(row_target=256, min_steps=2, prefer_even_steps=False,
                vmem_budget=100 << 20)


def learned_aggregation_layer(x, wq, wk, wv, wp, bp, *, num_heads=1,
                              qk_scale=None, compute_dtype=jnp.bfloat16):
    B, N1, C = x.shape
    N = N1 - 1
    assert C % num_heads == 0
    head_dim = C // num_heads
    scale = qk_scale if qk_scale is not None else head_dim ** (-0.5)
    f32 = jnp.float32
    out_dtype = x.dtype

    # One-time operand prep in the wrapper (free relative to the kernel):
    # pre-transpose to (in, out), fold the attention scale into Wq *in f32*
    # before the bf16 cast, fuse Wk|Wv, cast everything to compute_dtype
    # (all matmuls accumulate in f32 via preferred_element_type).
    wq_t = (wq.astype(f32).T * scale).astype(compute_dtype)               # (C, C)
    wkv_t = jnp.concatenate([wk.T, wv.T], axis=1).astype(compute_dtype)   # (C, 2C)
    wp_t = wp.T.astype(compute_dtype)                                     # (C, C)
    bp2 = bp.reshape(1, C).astype(compute_dtype)                          # (1, C)
    x_c = x.astype(compute_dtype)

    gen = _tpu_generation_defaults()
    vmem_budget = gen.pop("vmem_budget")
    TB = _pick_batch_tile(B, N, **gen)

    in_bytes = jnp.dtype(compute_dtype).itemsize
    out_bytes = jnp.dtype(out_dtype).itemsize
    divisors = [d for d in range(1, B + 1) if B % d == 0]
    while TB > 1 and _step_vmem_bytes(TB, N1, C, in_bytes, out_bytes, 2) > vmem_budget:
        TB = max(d for d in divisors if d < TB)
    est = _step_vmem_bytes(TB, N1, C, in_bytes, out_bytes, 2)
    vmem_limit = int(min(max(est * 1.5 + (4 << 20), 32 << 20), vmem_budget))

    kernel = partial(_agg_kernel, num_heads=num_heads)

    def build(single_buffer_weights):
        wkw = {"pipeline_mode": pl.Buffered(1)} if single_buffer_weights else {}
        grid_spec = pltpu.PrefetchScalarGridSpec(
            num_scalar_prefetch=0,
            grid=(B // TB,),
            in_specs=[
                # NOTE: raise to pl.Buffered(3) on v6e if a trace shows exposed DMA.
                pl.BlockSpec((TB, N1, C), lambda b: (b, 0, 0)),      # x tile (TB batches)
                pl.BlockSpec((C, C), lambda b: (0, 0), **wkw),       # Wq.T * scale
                pl.BlockSpec((C, 2 * C), lambda b: (0, 0), **wkw),   # [Wk.T | Wv.T]
                pl.BlockSpec((C, C), lambda b: (0, 0), **wkw),       # Wproj.T
                pl.BlockSpec((1, C), lambda b: (0, 0), **wkw),       # proj bias
            ],
            out_specs=pl.BlockSpec((TB, N, C), lambda b: (b, 0, 0)),
        )
        return pl.pallas_call(
            kernel,
            out_shape=jax.ShapeDtypeStruct((B, N, C), out_dtype),
            grid_spec=grid_spec,
            compiler_params=pltpu.CompilerParams(
                dimension_semantics=("parallel",),
                vmem_limit_bytes=vmem_limit,
            ),
        )

    try:
        # Weight/bias blocks have a constant index_map -> one VMEM buffer is enough.
        return build(True)(x_c, wq_t, wkv_t, wp_t, bp2)
    except Exception:
        # TODO(synk): this JAX build rejected pipeline_mode=pl.Buffered(1) on
        # pallas_call BlockSpecs; falling back to default double-buffered weights.
        return build(False)(x_c, wq_t, wkv_t, wp_t, bp2)


def _reference(x, wq, wk, wv, wp, bp, *, num_heads, qk_scale=None,
               compute_dtype=jnp.float32):
    """Pure-JAX transcription of the PyTorch forward (f32 accumulation), with
    the same operand-dtype casting the Pallas wrapper applies."""
    B, N1, C = x.shape
    N = N1 - 1
    hd = C // num_heads
    scale = qk_scale if qk_scale is not None else hd ** (-0.5)
    f32 = jnp.float32
    cast = lambda a: a.astype(compute_dtype).astype(f32)

    xc = cast(x)
    wq_c = cast(wq.astype(f32) * scale)           # scale folded pre-cast, as in the wrapper
    wk_c, wv_c, wp_c, bp_c = cast(wk), cast(wv), cast(wp), cast(bp)

    q = (xc[:, 0] @ wq_c.T).reshape(B, 1, num_heads, hd).transpose(0, 2, 1, 3)
    k = (xc[:, 1:] @ wk_c.T).reshape(B, N, num_heads, hd).transpose(0, 2, 1, 3)
    v = (xc[:, 1:] @ wv_c.T).reshape(B, N, num_heads, hd).transpose(0, 2, 1, 3)
    attn = jnp.einsum("bhqd,bhkd->bhqk", q, k)
    attn = jax.nn.softmax(attn, axis=-1)
    attn = jnp.swapaxes(attn, -2, -1)
    out = (attn * v).transpose(0, 2, 1, 3).reshape(B, N, C)
    out = out @ wp_c.T + bp_c.reshape(1, -1)
    return out


if __name__ == "__main__":
    B, N, C = 4, 8, 32          # batch, num_patches, dim
    N1 = N + 1                  # +1 for the cls token

    key = jax.random.PRNGKey(0)
    kx, kq, kk, kv, kp, kb = jax.random.split(key, 6)

    x = jax.random.normal(kx, (B, N1, C), dtype=jnp.float32)
    # Deterministic parameter init (qkv_bias=False; proj has bias).
    wq = jax.random.normal(kq, (C, C), dtype=jnp.float32) * (C ** -0.5)
    wk = jax.random.normal(kk, (C, C), dtype=jnp.float32) * (C ** -0.5)
    wv = jax.random.normal(kv, (C, C), dtype=jnp.float32) * (C ** -0.5)
    wp = jax.random.normal(kp, (C, C), dtype=jnp.float32) * (C ** -0.5)
    bp = jax.random.normal(kb, (C,), dtype=jnp.float32) * 0.01

    # Exercise both the single-head (module default) and multi-head paths.
    for num_heads in (1, 2):
        out = learned_aggregation_layer(x, wq, wk, wv, wp, bp, num_heads=num_heads)
        out = jax.block_until_ready(out)
        ref = _reference(x, wq, wk, wv, wp, bp, num_heads=num_heads,
                         compute_dtype=jnp.bfloat16)
        assert out.shape == (B, N, C)
        err = float(jnp.max(jnp.abs(out - ref)))
        assert jnp.allclose(out, ref, atol=2e-2, rtol=2e-2), (
            f"mismatch (H={num_heads}), max abs err={err}")

    print("KERNEL_OK")
</pallas_src>

<mosaic_0001>
module attributes {stable_mosaic.version = 11 : i64} {
  func.func @_agg_kernel(%arg0: i32, %arg1: memref<2x9x32xbf16, #tpu.memory_space<vmem>>, %arg2: memref<32x32xbf16, #tpu.memory_space<vmem>>, %arg3: memref<32x64xbf16, #tpu.memory_space<vmem>>, %arg4: memref<32x32xbf16, #tpu.memory_space<vmem>>, %arg5: memref<1x32xbf16, #tpu.memory_space<vmem>>, %arg6: memref<2x8x32xf32, #tpu.memory_space<vmem>>) attributes {dimension_semantics = [#tpu.dimension_semantics<parallel>], iteration_bounds = array<i64: 2>, scalar_prefetch = 0 : i64, scratch_operands = 0 : i64, tpu.core_type = #tpu.core_type<tc>, window_params = [{transform_indices = @transform_0, window_bounds = array<i64: 2, 9, 32>}, {pipeline_mode = #tpu.pipeline_mode<synchronous>, transform_indices = @transform_1, window_bounds = array<i64: 32, 32>}, {pipeline_mode = #tpu.pipeline_mode<synchronous>, transform_indices = @transform_2, window_bounds = array<i64: 32, 64>}, {pipeline_mode = #tpu.pipeline_mode<synchronous>, transform_indices = @transform_3, window_bounds = array<i64: 32, 32>}, {pipeline_mode = #tpu.pipeline_mode<synchronous>, transform_indices = @transform_4, window_bounds = array<i64: 1, 32>}, {transform_indices = @transform_5, window_bounds = array<i64: 2, 8, 32>}]} {
    %c0 = arith.constant 0 : index
    %c0_0 = arith.constant 0 : index
    %c0_1 = arith.constant 0 : index
    %0 = vector.load %arg1[%c0, %c0_0, %c0_1] : memref<2x9x32xbf16, #tpu.memory_space<vmem>>, vector<2x1x32xbf16>
    %1 = vector.shape_cast %0 : vector<2x1x32xbf16> to vector<2x32xbf16>
    %c0_2 = arith.constant 0 : index
    %c0_3 = arith.constant 0 : index
    %2 = vector.load %arg2[%c0_2, %c0_3] : memref<32x32xbf16, #tpu.memory_space<vmem>>, vector<32x32xbf16>
    %cst = arith.constant dense<0.000000e+00> : vector<2x32xf32>
    %3 = tpu.matmul %1, %2, %cst {dimension_numbers = #tpu.dot_dimension_numbers<[1], [0], [0], [1], [0, 0, 1, 1], [], []>} : vector<2x32xbf16>, vector<32x32xbf16>, vector<2x32xf32> -> vector<2x32xf32>
    %c0_4 = arith.constant 0 : index
    %c0_5 = arith.constant 0 : index
    %4 = vector.load %arg3[%c0_4, %c0_5] : memref<32x64xbf16, #tpu.memory_space<vmem>>, vector<32x64xbf16>
    %c0_6 = arith.constant 0 : index
    %c0_7 = arith.constant 0 : index
    %5 = vector.load %arg4[%c0_6, %c0_7] : memref<32x32xbf16, #tpu.memory_space<vmem>>, vector<32x32xbf16>
    %c0_8 = arith.constant 0 : index
    %c0_9 = arith.constant 0 : index
    %6 = vector.load %arg5[%c0_8, %c0_9] : memref<1x32xbf16, #tpu.memory_space<vmem>>, vector<1x32xbf16>
    %c0_10 = arith.constant 0 : index
    %c1 = arith.constant 1 : index
    %c0_11 = arith.constant 0 : index
    %7 = vector.load %arg1[%c0_10, %c1, %c0_11] : memref<2x9x32xbf16, #tpu.memory_space<vmem>>, vector<1x8x32xbf16>
    %8 = vector.shape_cast %7 : vector<1x8x32xbf16> to vector<8x32xbf16>
    %cst_12 = arith.constant dense<0.000000e+00> : vector<8x64xf32>
    %9 = tpu.matmul %8, %4, %cst_12 {dimension_numbers = #tpu.dot_dimension_numbers<[1], [0], [0], [1], [0, 0, 1, 1], [], []>} : vector<8x32xbf16>, vector<32x64xbf16>, vector<8x64xf32> -> vector<8x64xf32>
    %10 = vector.extract_strided_slice %9 {offsets = [0, 0], sizes = [8, 32], strides = [1, 1]} : vector<8x64xf32> to vector<8x32xf32>
    %11 = vector.extract_strided_slice %9 {offsets = [0, 32], sizes = [8, 32], strides = [1, 1]} : vector<8x64xf32> to vector<8x32xf32>
    %12 = vector.extract_strided_slice %3 {offsets = [0, 0], sizes = [1, 32], strides = [1, 1]} : vector<2x32xf32> to vector<1x32xf32>
    %13 = vector.broadcast %12 : vector<1x32xf32> to vector<8x32xf32>
    %14 = arith.mulf %10, %13 : vector<8x32xf32>
    %cst_13 = arith.constant dense<0.000000e+00> : vector<8xf32>
    %15 = vector.multi_reduction <add>, %14, %cst_13 [1] : vector<8x32xf32> to vector<8xf32>
    %16 = vector.shape_cast %15 : vector<8xf32> to vector<8x1xf32>
    %cst_14 = arith.constant dense<0xFF800000> : vector<1xf32>
    %17 = vector.multi_reduction <maximumf>, %16, %cst_14 [0] : vector<8x1xf32> to vector<1xf32>
    %18 = vector.shape_cast %17 : vector<1xf32> to vector<1x1xf32>
    %19 = vector.broadcast %18 : vector<1x1xf32> to vector<8x1xf32>
    %20 = arith.subf %16, %19 : vector<8x1xf32>
    %21 = math.exp %20 : vector<8x1xf32>
    %cst_15 = arith.constant dense<0.000000e+00> : vector<1xf32>
    %22 = vector.multi_reduction <add>, %21, %cst_15 [0] : vector<8x1xf32> to vector<1xf32>
    %23 = vector.shape_cast %22 : vector<1xf32> to vector<1x1xf32>
    %24 = tpu.reciprocal %23 {approx = true} : vector<1x1xf32> -> vector<1x1xf32>
    %25 = vector.broadcast %24 : vector<1x1xf32> to vector<8x1xf32>
    %26 = arith.mulf %21, %25 : vector<8x1xf32>
    %27 = vector.broadcast %26 : vector<8x1xf32> to vector<8x32xf32>
    %28 = arith.mulf %11, %27 : vector<8x32xf32>
    %29 = arith.truncf %28 : vector<8x32xf32> to vector<8x32xbf16>
    %cst_16 = arith.constant dense<0.000000e+00> : vector<8x32xf32>
    %30 = tpu.matmul %29, %5, %cst_16 {dimension_numbers = #tpu.dot_dimension_numbers<[1], [0], [0], [1], [0, 0, 1, 1], [], []>} : vector<8x32xbf16>, vector<32x32xbf16>, vector<8x32xf32> -> vector<8x32xf32>
    %31 = arith.extf %6 : vector<1x32xbf16> to vector<1x32xf32>
    %32 = vector.broadcast %31 : vector<1x32xf32> to vector<8x32xf32>
    %33 = arith.addf %30, %32 : vector<8x32xf32>
    %c0_17 = arith.constant 0 : index
    %c0_18 = arith.constant 0 : index
    %c0_19 = arith.constant 0 : index
    %34 = vector.load %arg6[%c0_17, %c0_18, %c0_19] : memref<2x8x32xf32, #tpu.memory_space<vmem>>, vector<1x8x32xf32>
    %35 = vector.shape_cast %34 : vector<1x8x32xf32> to vector<8x32xf32>
    %36 = vector.shape_cast %33 : vector<8x32xf32> to vector<1x8x32xf32>
    tpu.vector_store %arg6[%c0_17, %c0_18, %c0_19], %36 {strides = array<i32>} : memref<2x8x32xf32, #tpu.memory_space<vmem>>, vector<1x8x32xf32>,
    %c1_20 = arith.constant 1 : index
    %c1_21 = arith.constant 1 : index
    %c0_22 = arith.constant 0 : index
    %37 = vector.load %arg1[%c1_20, %c1_21, %c0_22] : memref<2x9x32xbf16, #tpu.memory_space<vmem>>, vector<1x8x32xbf16>
    %38 = vector.shape_cast %37 : vector<1x8x32xbf16> to vector<8x32xbf16>
    %cst_23 = arith.constant dense<0.000000e+00> : vector<8x64xf32>
    %39 = tpu.matmul %38, %4, %cst_23 {dimension_numbers = #tpu.dot_dimension_numbers<[1], [0], [0], [1], [0, 0, 1, 1], [], []>} : vector<8x32xbf16>, vector<32x64xbf16>, vector<8x64xf32> -> vector<8x64xf32>
    %40 = vector.extract_strided_slice %39 {offsets = [0, 0], sizes = [8, 32], strides = [1, 1]} : vector<8x64xf32> to vector<8x32xf32>
    %41 = vector.extract_strided_slice %39 {offsets = [0, 32], sizes = [8, 32], strides = [1, 1]} : vector<8x64xf32> to vector<8x32xf32>
    %42 = vector.extract_strided_slice %3 {offsets = [1, 0], sizes = [1, 32], strides = [1, 1]} : vector<2x32xf32> to vector<1x32xf32>
    %43 = vector.broadcast %42 : vector<1x32xf32> to vector<8x32xf32>
    %44 = arith.mulf %40, %43 : vector<8x32xf32>
    %cst_24 = arith.constant dense<0.000000e+00> : vector<8xf32>
    %45 = vector.multi_reduction <add>, %44, %cst_24 [1] : vector<8x32xf32> to vector<8xf32>
    %46 = vector.shape_cast %45 : vector<8xf32> to vector<8x1xf32>
    %cst_25 = arith.constant dense<0xFF800000> : vector<1xf32>
    %47 = vector.multi_reduction <maximumf>, %46, %cst_25 [0] : vector<8x1xf32> to vector<1xf32>
    %48 = vector.shape_cast %47 : vector<1xf32> to vector<1x1xf32>
    %49 = vector.broadcast %48 : vector<1x1xf32> to vector<8x1xf32>
    %50 = arith.subf %46, %49 : vector<8x1xf32>
    %51 = math.exp %50 : vector<8x1xf32>
    %cst_26 = arith.constant dense<0.000000e+00> : vector<1xf32>
    %52 = vector.multi_reduction <add>, %51, %cst_26 [0] : vector<8x1xf32> to vector<1xf32>
    %53 = vector.shape_cast %52 : vector<1xf32> to vector<1x1xf32>
    %54 = tpu.reciprocal %53 {approx = true} : vector<1x1xf32> -> vector<1x1xf32>
    %55 = vector.broadcast %54 : vector<1x1xf32> to vector<8x1xf32>
    %56 = arith.mulf %51, %55 : vector<8x1xf32>
    %57 = vector.broadcast %56 : vector<8x1xf32> to vector<8x32xf32>
    %58 = arith.mulf %41, %57 : vector<8x32xf32>
    %59 = arith.truncf %58 : vector<8x32xf32> to vector<8x32xbf16>
    %cst_27 = arith.constant dense<0.000000e+00> : vector<8x32xf32>
    %60 = tpu.matmul %59, %5, %cst_27 {dimension_numbers = #tpu.dot_dimension_numbers<[1], [0], [0], [1], [0, 0, 1, 1], [], []>} : vector<8x32xbf16>, vector<32x32xbf16>, vector<8x32xf32> -> vector<8x32xf32>
    %61 = arith.extf %6 : vector<1x32xbf16> to vector<1x32xf32>
    %62 = vector.broadcast %61 : vector<1x32xf32> to vector<8x32xf32>
    %63 = arith.addf %60, %62 : vector<8x32xf32>
    %c1_28 = arith.constant 1 : index
    %c0_29 = arith.constant 0 : index
    %c0_30 = arith.constant 0 : index
    %64 = vector.load %arg6[%c1_28, %c0_29, %c0_30] : memref<2x8x32xf32, #tpu.memory_space<vmem>>, vector<1x8x32xf32>
    %65 = vector.shape_cast %64 : vector<1x8x32xf32> to vector<8x32xf32>
    %66 = vector.shape_cast %63 : vector<8x32xf32> to vector<1x8x32xf32>
    tpu.vector_store %arg6[%c1_28, %c0_29, %c0_30], %66 {strides = array<i32>} : memref<2x8x32xf32, #tpu.memory_space<vmem>>, vector<1x8x32xf32>,
    return
  }
  func.func @transform_0(%arg0: i32) -> (i32, i32, i32) {
    %c0_i32 = arith.constant 0 : i32
    %c0_i32_0 = arith.constant 0 : i32
    %c0_i32_1 = arith.constant 0 : i32
    return %arg0, %c0_i32, %c0_i32_0 : i32, i32, i32
  }
  func.func @transform_1(%arg0: i32) -> (i32, i32) {
    %c0_i32 = arith.constant 0 : i32
    %c0_i32_0 = arith.constant 0 : i32
    %c0_i32_1 = arith.constant 0 : i32
    return %c0_i32, %c0_i32_0 : i32, i32
  }
  func.func @transform_2(%arg0: i32) -> (i32, i32) {
    %c0_i32 = arith.constant 0 : i32
    %c0_i32_0 = arith.constant 0 : i32
    %c0_i32_1 = arith.constant 0 : i32
    return %c0_i32, %c0_i32_0 : i32, i32
  }
  func.func @transform_3(%arg0: i32) -> (i32, i32) {
    %c0_i32 = arith.constant 0 : i32
    %c0_i32_0 = arith.constant 0 : i32
    %c0_i32_1 = arith.constant 0 : i32
    return %c0_i32, %c0_i32_0 : i32, i32
  }
  func.func @transform_4(%arg0: i32) -> (i32, i32) {
    %c0_i32 = arith.constant 0 : i32
    %c0_i32_0 = arith.constant 0 : i32
    %c0_i32_1 = arith.constant 0 : i32
    return %c0_i32, %c0_i32_0 : i32, i32
  }
  func.func @transform_5(%arg0: i32) -> (i32, i32, i32) {
    %c0_i32 = arith.constant 0 : i32
    %c0_i32_0 = arith.constant 0 : i32
    %c0_i32_1 = arith.constant 0 : i32
    return %arg0, %c0_i32, %c0_i32_0 : i32, i32, i32
  }
}

module attributes {stable_mosaic.version = 11 : i64} {
  func.func @_agg_kernel(%arg0: i32, %arg1: memref<2x9x32xbf16, #tpu.memory_space<vmem>>, %arg2: memref<32x32xbf16, #tpu.memory_space<vmem>>, %arg3: memref<32x64xbf16, #tpu.memory_space<vmem>>, %arg4: memref<32x32xbf16, #tpu.memory_space<vmem>>, %arg5: memref<1x32xbf16, #tpu.memory_space<vmem>>, %arg6: memref<2x8x32xf32, #tpu.memory_space<vmem>>) attributes {dimension_semantics = [#tpu.dimension_semantics<parallel>], iteration_bounds = array<i64: 2>, scalar_prefetch = 0 : i64, scratch_operands = 0 : i64, tpu.core_type = #tpu.core_type<tc>, window_params = [{transform_indices = @transform_0, window_bounds = array<i64: 2, 9, 32>}, {pipeline_mode = #tpu.pipeline_mode<synchronous>, transform_indices = @transform_1, window_bounds = array<i64: 32, 32>}, {pipeline_mode = #tpu.pipeline_mode<synchronous>, transform_indices = @transform_2, window_bounds = array<i64: 32, 64>}, {pipeline_mode = #tpu.pipeline_mode<synchronous>, transform_indices = @transform_3, window_bounds = array<i64: 32, 32>}, {pipeline_mode = #tpu.pipeline_mode<synchronous>, transform_indices = @transform_4, window_bounds = array<i64: 1, 32>}, {transform_indices = @transform_5, window_bounds = array<i64: 2, 8, 32>}]} {
    %c0 = arith.constant 0 : index
    %c0_0 = arith.constant 0 : index
    %c0_1 = arith.constant 0 : index
    %0 = vector.load %arg1[%c0, %c0_0, %c0_1] : memref<2x9x32xbf16, #tpu.memory_space<vmem>>, vector<2x1x32xbf16>
    %1 = vector.shape_cast %0 : vector<2x1x32xbf16> to vector<2x32xbf16>
    %c0_2 = arith.constant 0 : index
    %c0_3 = arith.constant 0 : index
    %2 = vector.load %arg2[%c0_2, %c0_3] : memref<32x32xbf16, #tpu.memory_space<vmem>>, vector<32x32xbf16>
    %cst = arith.constant dense<0.000000e+00> : vector<2x32xf32>
    %3 = tpu.matmul %1, %2, %cst {dimension_numbers = #tpu.dot_dimension_numbers<[1], [0], [0], [1], [0, 0, 1, 1], [], []>} : vector<2x32xbf16>, vector<32x32xbf16>, vector<2x32xf32> -> vector<2x32xf32>
    %c0_4 = arith.constant 0 : index
    %c0_5 = arith.constant 0 : index
    %4 = vector.load %arg3[%c0_4, %c0_5] : memref<32x64xbf16, #tpu.memory_space<vmem>>, vector<32x64xbf16>
    %c0_6 = arith.constant 0 : index
    %c0_7 = arith.constant 0 : index
    %5 = vector.load %arg4[%c0_6, %c0_7] : memref<32x32xbf16, #tpu.memory_space<vmem>>, vector<32x32xbf16>
    %c0_8 = arith.constant 0 : index
    %c0_9 = arith.constant 0 : index
    %6 = vector.load %arg5[%c0_8, %c0_9] : memref<1x32xbf16, #tpu.memory_space<vmem>>, vector<1x32xbf16>
    %c0_10 = arith.constant 0 : index
    %c1 = arith.constant 1 : index
    %c0_11 = arith.constant 0 : index
    %7 = vector.load %arg1[%c0_10, %c1, %c0_11] : memref<2x9x32xbf16, #tpu.memory_space<vmem>>, vector<1x8x32xbf16>
    %8 = vector.shape_cast %7 : vector<1x8x32xbf16> to vector<8x32xbf16>
    %cst_12 = arith.constant dense<0.000000e+00> : vector<8x64xf32>
    %9 = tpu.matmul %8, %4, %cst_12 {dimension_numbers = #tpu.dot_dimension_numbers<[1], [0], [0], [1], [0, 0, 1, 1], [], []>} : vector<8x32xbf16>, vector<32x64xbf16>, vector<8x64xf32> -> vector<8x64xf32>
    %10 = vector.extract_strided_slice %9 {offsets = [0, 0], sizes = [8, 32], strides = [1, 1]} : vector<8x64xf32> to vector<8x32xf32>
    %11 = vector.extract_strided_slice %9 {offsets = [0, 32], sizes = [8, 32], strides = [1, 1]} : vector<8x64xf32> to vector<8x32xf32>
    %12 = vector.extract_strided_slice %3 {offsets = [0, 0], sizes = [1, 32], strides = [1, 1]} : vector<2x32xf32> to vector<1x32xf32>
    %13 = vector.broadcast %12 : vector<1x32xf32> to vector<8x32xf32>
    %14 = arith.mulf %10, %13 : vector<8x32xf32>
    %cst_13 = arith.constant dense<0.000000e+00> : vector<8xf32>
    %15 = vector.multi_reduction <add>, %14, %cst_13 [1] : vector<8x32xf32> to vector<8xf32>
    %16 = vector.shape_cast %15 : vector<8xf32> to vector<8x1xf32>
    %cst_14 = arith.constant dense<0xFF800000> : vector<1xf32>
    %17 = vector.multi_reduction <maximumf>, %16, %cst_14 [0] : vector<8x1xf32> to vector<1xf32>
    %18 = vector.shape_cast %17 : vector<1xf32> to vector<1x1xf32>
    %19 = vector.broadcast %18 : vector<1x1xf32> to vector<8x1xf32>
    %20 = arith.subf %16, %19 : vector<8x1xf32>
    %21 = math.exp %20 : vector<8x1xf32>
    %cst_15 = arith.constant dense<0.000000e+00> : vector<1xf32>
    %22 = vector.multi_reduction <add>, %21, %cst_15 [0] : vector<8x1xf32> to vector<1xf32>
    %23 = vector.shape_cast %22 : vector<1xf32> to vector<1x1xf32>
    %24 = tpu.reciprocal %23 {approx = true} : vector<1x1xf32> -> vector<1x1xf32>
    %25 = vector.broadcast %24 : vector<1x1xf32> to vector<8x1xf32>
    %26 = arith.mulf %21, %25 : vector<8x1xf32>
    %27 = vector.broadcast %26 : vector<8x1xf32> to vector<8x32xf32>
    %28 = arith.mulf %11, %27 : vector<8x32xf32>
    %29 = arith.truncf %28 : vector<8x32xf32> to vector<8x32xbf16>
    %cst_16 = arith.constant dense<0.000000e+00> : vector<8x32xf32>
    %30 = tpu.matmul %29, %5, %cst_16 {dimension_numbers = #tpu.dot_dimension_numbers<[1], [0], [0], [1], [0, 0, 1, 1], [], []>} : vector<8x32xbf16>, vector<32x32xbf16>, vector<8x32xf32> -> vector<8x32xf32>
    %31 = arith.extf %6 : vector<1x32xbf16> to vector<1x32xf32>
    %32 = vector.broadcast %31 : vector<1x32xf32> to vector<8x32xf32>
    %33 = arith.addf %30, %32 : vector<8x32xf32>
    %c0_17 = arith.constant 0 : index
    %c0_18 = arith.constant 0 : index
    %c0_19 = arith.constant 0 : index
    %34 = vector.load %arg6[%c0_17, %c0_18, %c0_19] : memref<2x8x32xf32, #tpu.memory_space<vmem>>, vector<1x8x32xf32>
    %35 = vector.shape_cast %34 : vector<1x8x32xf32> to vector<8x32xf32>
    %36 = vector.shape_cast %33 : vector<8x32xf32> to vector<1x8x32xf32>
    tpu.vector_store %arg6[%c0_17, %c0_18, %c0_19], %36 {strides = array<i32>} : memref<2x8x32xf32, #tpu.memory_space<vmem>>, vector<1x8x32xf32>,
    %c1_20 = arith.constant 1 : index
    %c1_21 = arith.constant 1 : index
    %c0_22 = arith.constant 0 : index
    %37 = vector.load %arg1[%c1_20, %c1_21, %c0_22] : memref<2x9x32xbf16, #tpu.memory_space<vmem>>, vector<1x8x32xbf16>
    %38 = vector.shape_cast %37 : vector<1x8x32xbf16> to vector<8x32xbf16>
    %cst_23 = arith.constant dense<0.000000e+00> : vector<8x64xf32>
    %39 = tpu.matmul %38, %4, %cst_23 {dimension_numbers = #tpu.dot_dimension_numbers<[1], [0], [0], [1], [0, 0, 1, 1], [], []>} : vector<8x32xbf16>, vector<32x64xbf16>, vector<8x64xf32> -> vector<8x64xf32>
    %40 = vector.extract_strided_slice %39 {offsets = [0, 0], sizes = [8, 32], strides = [1, 1]} : vector<8x64xf32> to vector<8x32xf32>
    %41 = vector.extract_strided_slice %39 {offsets = [0, 32], sizes = [8, 32], strides = [1, 1]} : vector<8x64xf32> to vector<8x32xf32>
    %42 = vector.extract_strided_slice %3 {offsets = [1, 0], sizes = [1, 32], strides = [1, 1]} : vector<2x32xf32> to vector<1x32xf32>
    %43 = vector.broadcast %42 : vector<1x32xf32> to vector<8x32xf32>
    %44 = arith.mulf %40, %43 : vector<8x32xf32>
    %cst_24 = arith.constant dense<0.000000e+00> : vector<8xf32>
    %45 = vector.multi_reduction <add>, %44, %cst_24 [1] : vector<8x32xf32> to vector<8xf32>
    %46 = vector.shape_cast %45 : vector<8xf32> to vector<8x1xf32>
    %cst_25 = arith.constant dense<0xFF800000> : vector<1xf32>
    %47 = vector.multi_reduction <maximumf>, %46, %cst_25 [0] : vector<8x1xf32> to vector<1xf32>
    %48 = vector.shape_cast %47 : vector<1xf32> to vector<1x1xf32>
    %49 = vector.broadcast %48 : vector<1x1xf32> to vector<8x1xf32>
    %50 = arith.subf %46, %49 : vector<8x1xf32>
    %51 = math.exp %50 : vector<8x1xf32>
    %cst_26 = arith.constant dense<0.000000e+00> : vector<1xf32>
    %52 = vector.multi_reduction <add>, %51, %cst_26 [0] : vector<8x1xf32> to vector<1xf32>
    %53 = vector.shape_cast %52 : vector<1xf32> to vector<1x1xf32>
    %54 = tpu.reciprocal %53 {approx = true} : vector<1x1xf32> -> vector<1x1xf32>
    %55 = vector.broadcast %54 : vector<1x1xf32> to vector<8x1xf32>
    %56 = arith.mulf %51, %55 : vector<8x1xf32>
    %57 = vector.broadcast %56 : vector<8x1xf32> to vector<8x32xf32>
    %58 = arith.mulf %41, %57 : vector<8x32xf32>
    %59 = arith.truncf %58 : vector<8x32xf32> to vector<8x32xbf16>
    %cst_27 = arith.constant dense<0.000000e+00> : vector<8x32xf32>
    %60 = tpu.matmul %59, %5, %cst_27 {dimension_numbers = #tpu.dot_dimension_numbers<[1], [0], [0], [1], [0, 0, 1, 1], [], []>} : vector<8x32xbf16>, vector<32x32xbf16>, vector<8x32xf32> -> vector<8x32xf32>
    %61 = arith.extf %6 : vector<1x32xbf16> to vector<1x32xf32>
    %62 = vector.broadcast %61 : vector<1x32xf32> to vector<8x32xf32>
    %63 = arith.addf %60, %62 : vector<8x32xf32>
    %c1_28 = arith.constant 1 : index
    %c0_29 = arith.constant 0 : index
    %c0_30 = arith.constant 0 : index
    %64 = vector.load %arg6[%c1_28, %c0_29, %c0_30] : memref<2x8x32xf32, #tpu.memory_space<vmem>>, vector<1x8x32xf32>
    %65 = vector.shape_cast %64 : vector<1x8x32xf32> to vector<8x32xf32>
    %66 = vector.shape_cast %63 : vector<8x32xf32> to vector<1x8x32xf32>
    tpu.vector_store %arg6[%c1_28, %c0_29, %c0_30], %66 {strides = array<i32>} : memref<2x8x32xf32, #tpu.memory_space<vmem>>, vector<1x8x32xf32>,
    return
  }
  func.func @transform_0(%arg0: i32) -> (i32, i32, i32) {
    %c0_i32 = arith.constant 0 : i32
    %c0_i32_0 = arith.constant 0 : i32
    %c0_i32_1 = arith.constant 0 : i32
    return %arg0, %c0_i32, %c0_i32_0 : i32, i32, i32
  }
  func.func @transform_1(%arg0: i32) -> (i32, i32) {
    %c0_i32 = arith.constant 0 : i32
    %c0_i32_0 = arith.constant 0 : i32
    %c0_i32_1 = arith.constant 0 : i32
    return %c0_i32, %c0_i32_0 : i32, i32
  }
  func.func @transform_2(%arg0: i32) -> (i32, i32) {
    %c0_i32 = arith.constant 0 : i32
    %c0_i32_0 = arith.constant 0 : i32
    %c0_i32_1 = arith.constant 0 : i32
    return %c0_i32, %c0_i32_0 : i32, i32
  }
  func.func @transform_3(%arg0: i32) -> (i32, i32) {
    %c0_i32 = arith.constant 0 : i32
    %c0_i32_0 = arith.constant 0 : i32
    %c0_i32_1 = arith.constant 0 : i32
    return %c0_i32, %c0_i32_0 : i32, i32
  }
  func.func @transform_4(%arg0: i32) -> (i32, i32) {
    %c0_i32 = arith.constant 0 : i32
    %c0_i32_0 = arith.constant 0 : i32
    %c0_i32_1 = arith.constant 0 : i32
    return %c0_i32, %c0_i32_0 : i32, i32
  }
  func.func @transform_5(%arg0: i32) -> (i32, i32, i32) {
    %c0_i32 = arith.constant 0 : i32
    %c0_i32_0 = arith.constant 0 : i32
    %c0_i32_1 = arith.constant 0 : i32
    return %arg0, %c0_i32, %c0_i32_0 : i32, i32, i32
  }
}

</mosaic_0001>

<llo_original>
// kernel: tpu_custom_call.1
$region0: #{tpu_custom_call.1}
  #allocation0 [shape = 'u32[]', space=smem, size = 0x4, offset = 0x4, fixed_abs, tag = 'smem constant byte address 0x4 - core index']
  #allocation1 [shape = 'u32[72,128]{1,0:T(1,128)}', space=vmem, size = 0x9000, scoped, tag = 'internal scratch']
  %s0 = inlined_call_operand.vmem [shape: bf16[4,9,32], index: 0, kind: input, shape index: {}]
  %s1 = inlined_call_operand.vmem [shape: bf16[32,32], index: 1, kind: input, shape index: {}]
  %s2 = inlined_call_operand.vmem [shape: bf16[32,64], index: 2, kind: input, shape index: {}]
  %s3 = inlined_call_operand.vmem [shape: bf16[32,32], index: 3, kind: input, shape index: {}]
  %s4 = inlined_call_operand.vmem [shape: bf16[1,32], index: 4, kind: input, shape index: {}]
  %s5 = inlined_call_operand.hbm [shape: f32[4,8,32], index: 5, kind: output, shape index: {}]
  %s6 = sld [smem:[#allocation0]]
  $region53: #{tpu_custom_call.1} parent=0
    _
  %s8 = ssub.s32 1, %s6
  %s9 = scalar_select 0, %s8, %s6
  $region1: #{tpu_custom_call.1} parent=0
    #allocation2 [shape = 'u8[16384]{0}', space=vmem, size = 0x4000, scoped, tag = 'output window, operand 0']
    #allocation3 [shape = 's32[2]{0}', space=sflag, size = 0x8, scoped, tag = 'scoped memory for tpu_custom_call.1']
    %10 = vsyncpa [#allocation3], 0
    %s11 = scalar_lea.sflag [#allocation3], 1
    %12 = vsyncpa %s11, 0
    loop: start=0, step=1, limit=4
    $region2: #{tpu_custom_call.1} parent=1 // loop_pre_header
      _
    $region3: #{tpu_custom_call.1} parent=1 // loop_header
      %s14 = sphi 0, %s18
      %p15 = scmp.ge.s32.totalorder %s14, 4
      %s24 = sphi 0, %s26
      %s27 = sphi 0, %s24
      %s28 = sphi 0, %s27
      %s44 = sphi 0, %s28
      %s48 = sphi 0, %s48
      %s50 = sphi 0, %s48
      %s51 = sphi 0, %s50
      %s65 = sphi 0, %s51
      %s69 = sphi 0, %s69
      %s71 = sphi 0, %s69
      %s72 = sphi 0, %s71
      %s86 = sphi 0, %s72
      %s90 = sphi 0, %s90
      %s92 = sphi 0, %s90
      %s93 = sphi 0, %s92
      %s107 = sphi 0, %s93
      %s111 = sphi 0, %s111
      %s113 = sphi 0, %s111
      %s114 = sphi 0, %s113
      %s128 = sphi 0, %s114
      %s134 = sphi 0, %s136
      %s137 = sphi 0, %s134
      %s138 = sphi 0, %s137
      %s154 = sphi 0, %s138
    $region4: #{tpu_custom_call.1} parent=1 // loop_header_branch
      %17 = sbr.rel (%p15) target = $region8
    $region5: #{tpu_custom_call.1} parent=1 // loop_body
      %s19 = ssub.s32 %s14, 1
      %s20 = ssub.s32 %s14, 2
      %s21 = sadd.s32 %s14, 1
      %s22 = ssub.s32 %s14, %s21
      %p23 = scmp.eq.s32.totalorder %s22, 0
      %s25 = sadd.s32 %s24, 1
      %s26 = scalar_select %p23, %s24, %s25
      %p29 = pneg %p23
      %p30 = scmp.eq.s32.totalorder %s14, 1
      %p31 = por %p29, %p30
      %p32 = scmp.ne.s32.totalorder %s24, %s27
      %p33 = scmp.eq.s32.totalorder %s14, 0
      %p34 = por %p32, %p33
      %p35 = scmp.ne.s32.totalorder %s24, %s27
      %p36 = scmp.eq.s32.totalorder %s19, 1
      %p37 = por %p35, %p36
      %p38 = scmp.ne.s32.totalorder %s27, %s28
      %p39 = scmp.eq.s32.totalorder %s19, 0
      %p40 = por %p38, %p39
      %p41 = scmp.ne.s32.totalorder %s27, %s28
      %p42 = scmp.eq.s32.totalorder %s20, 1
      %p43 = por %p41, %p42
      %p45 = scmp.ne.s32.totalorder %s28, %s44
      %p46 = scmp.eq.s32.totalorder %s20, 0
      %p47 = por %p45, %p46
      %s49 = sadd.s32 %s48, 1
      %p52 = scmp.eq.s32.totalorder %s14, 1
      %p53 = scmp.ne.s32.totalorder %s48, %s50
      %p54 = scmp.eq.s32.totalorder %s14, 0
      %p55 = por %p53, %p54
      %p56 = scmp.ne.s32.totalorder %s48, %s50
      %p57 = scmp.eq.s32.totalorder %s19, 1
      %p58 = por %p56, %p57
      %p59 = scmp.ne.s32.totalorder %s50, %s51
      %p60 = scmp.eq.s32.totalorder %s19, 0
      %p61 = por %p59, %p60
      %p62 = scmp.ne.s32.totalorder %s50, %s51
      %p63 = scmp.eq.s32.totalorder %s20, 1
      %p64 = por %p62, %p63
      %p66 = scmp.ne.s32.totalorder %s51, %s65
      %p67 = scmp.eq.s32.totalorder %s20, 0
      %p68 = por %p66, %p67
      %s70 = sadd.s32 %s69, 1
      %p73 = scmp.eq.s32.totalorder %s14, 1
      %p74 = scmp.ne.s32.totalorder %s69, %s71
      %p75 = scmp.eq.s32.totalorder %s14, 0
      %p76 = por %p74, %p75
      %p77 = scmp.ne.s32.totalorder %s69, %s71
      %p78 = scmp.eq.s32.totalorder %s19, 1
      %p79 = por %p77, %p78
      %p80 = scmp.ne.s32.totalorder %s71, %s72
      %p81 = scmp.eq.s32.totalorder %s19, 0
      %p82 = por %p80, %p81
      %p83 = scmp.ne.s32.totalorder %s71, %s72
      %p84 = scmp.eq.s32.totalorder %s20, 1
      %p85 = por %p83, %p84
      %p87 = scmp.ne.s32.totalorder %s72, %s86
      %p88 = scmp.eq.s32.totalorder %s20, 0
      %p89 = por %p87, %p88
      %s91 = sadd.s32 %s90, 1
      %p94 = scmp.eq.s32.totalorder %s14, 1
      %p95 = scmp.ne.s32.totalorder %s90, %s92
      %p96 = scmp.eq.s32.totalorder %s14, 0
      %p97 = por %p95, %p96
      %p98 = scmp.ne.s32.totalorder %s90, %s92
      %p99 = scmp.eq.s32.totalorder %s19, 1
      %p100 = por %p98, %p99
      %p101 = scmp.ne.s32.totalorder %s92, %s93
      %p102 = scmp.eq.s32.totalorder %s19, 0
      %p103 = por %p101, %p102
      %p104 = scmp.ne.s32.totalorder %s92, %s93
      %p105 = scmp.eq.s32.totalorder %s20, 1
      %p106 = por %p104, %p105
      %p108 = scmp.ne.s32.totalorder %s93, %s107
      %p109 = scmp.eq.s32.totalorder %s20, 0
      %p110 = por %p108, %p109
      %s112 = sadd.s32 %s111, 1
      %p115 = scmp.eq.s32.totalorder %s14, 1
      %p116 = scmp.ne.s32.totalorder %s111, %s113
      %p117 = scmp.eq.s32.totalorder %s14, 0
      %p118 = por %p116, %p117
      %p119 = scmp.ne.s32.totalorder %s111, %s113
      %p120 = scmp.eq.s32.totalorder %s19, 1
      %p121 = por %p119, %p120
      %p122 = scmp.ne.s32.totalorder %s113, %s114
      %p123 = scmp.eq.s32.totalorder %s19, 0
      %p124 = por %p122, %p123
      %p125 = scmp.ne.s32.totalorder %s113, %s114
      %p126 = scmp.eq.s32.totalorder %s20, 1
      %p127 = por %p125, %p126
      %p129 = scmp.ne.s32.totalorder %s114, %s128
      %p130 = scmp.eq.s32.totalorder %s20, 0
      %p131 = por %p129, %p130
      %s132 = ssub.s32 %s14, %s21
      %p133 = scmp.eq.s32.totalorder %s132, 0
      %s135 = sadd.s32 %s134, 1
      %s136 = scalar_select %p133, %s134, %s135
      %p139 = pneg %p133
      %p140 = scmp.eq.s32.totalorder %s14, 1
      %p141 = por %p139, %p140
      %p142 = scmp.ne.s32.totalorder %s134, %s137
      %p143 = scmp.eq.s32.totalorder %s14, 0
      %p144 = por %p142, %p143
      %p145 = scmp.ne.s32.totalorder %s134, %s137
      %p146 = scmp.eq.s32.totalorder %s19, 1
      %p147 = por %p145, %p146
      %p148 = scmp.ne.s32.totalorder %s137, %s138
      %p149 = scmp.eq.s32.totalorder %s19, 0
      %p150 = por %p148, %p149
      %p151 = scmp.ne.s32.totalorder %s137, %s138
      %p152 = scmp.eq.s32.totalorder %s20, 1
      %p153 = por %p151, %p152
      %p155 = scmp.ne.s32.totalorder %s138, %s154
      %p156 = scmp.eq.s32.totalorder %s20, 0
      %p157 = por %p155, %p156
      %p158 = scmp.le.s32.totalorder 1, %s14
      %p159 = scmp.lt.s32.totalorder %s14, 3
      %p160 = pnand %p158, %p159
      %p161 = pneg %p160
      // Predicated region
      $region9: #{tpu_custom_call.1} parent=5 // pred_check
        _
      $region10: #{tpu_custom_call.1} parent=5 // pred_check_branch
        %163 = sbr.rel (%p160) target = $region12
      $region11: #{tpu_custom_call.1} parent=5 // pred_region
        %s164 = ssub.s32 %s14, 1
        // Predicated region
        $region13: #{tpu_custom_call.1} parent=11 // pred_check
          %p165 = pneg %p61
        $region14: #{tpu_custom_call.1} parent=11 // pred_check_branch
          %167 = sbr.rel (%p165) target = $region16
        $region15: #{tpu_custom_call.1} parent=11 // pred_region
          _
        $region16: #{tpu_custom_call.1} parent=11 // pred_fallthru
          _
        // Predicated region
        $region17: #{tpu_custom_call.1} parent=11 // pred_check
          %p168 = pneg %p82
        $region18: #{tpu_custom_call.1} parent=11 // pred_check_branch
          %170 = sbr.rel (%p168) target = $region20
        $region19: #{tpu_custom_call.1} parent=11 // pred_region
          _
        $region20: #{tpu_custom_call.1} parent=11 // pred_fallthru
          _
        // Predicated region
        $region21: #{tpu_custom_call.1} parent=11 // pred_check
          %p171 = pneg %p103
        $region22: #{tpu_custom_call.1} parent=11 // pred_check_branch
          %173 = sbr.rel (%p171) target = $region24
        $region23: #{tpu_custom_call.1} parent=11 // pred_region
          _
        $region24: #{tpu_custom_call.1} parent=11 // pred_fallthru
          _
        // Predicated region
        $region25: #{tpu_custom_call.1} parent=11 // pred_check
          %p174 = pneg %p124
        $region26: #{tpu_custom_call.1} parent=11 // pred_check_branch
          %176 = sbr.rel (%p174) target = $region28
        $region27: #{tpu_custom_call.1} parent=11 // pred_region
          _
        $region28: #{tpu_custom_call.1} parent=11 // pred_fallthru
          _
      $region12: #{tpu_custom_call.1} parent=5 // pred_fallthru
        _
      %p177 = scmp.lt.s32.totalorder %s14, 2
      // Predicated region
      $region29: #{tpu_custom_call.1} parent=5 // pred_check
        %p178 = pneg %p177
      $region30: #{tpu_custom_call.1} parent=5 // pred_check_branch
        %180 = sbr.rel (%p178) target = $region32
      $region31: #{tpu_custom_call.1} parent=5 // pred_region
        // Predicated region
        $region33: #{tpu_custom_call.1} parent=31 // pred_check
          %p181 = pneg %p34
        $region34: #{tpu_custom_call.1} parent=31 // pred_check_branch
          %183 = sbr.rel (%p181) target = $region36
        $region35: #{tpu_custom_call.1} parent=31 // pred_region
          %s184 = smul.u32 2, %s14
          %p185 = scmp.lt.s32.totalorder %s184, 3
          %s186 = scalar_select %p185, %s184, 3
          %s187 = smul.addr %s186, 2
          %s188 = smul.addr %s187, 4
          %s189 = scalar_lea.vmem %s0, %s188
          %s190 = smul.u32 2, %s14
        $region36: #{tpu_custom_call.1} parent=31 // pred_fallthru
          _
      $region32: #{tpu_custom_call.1} parent=5 // pred_fallthru
        _
      %p191 = scmp.le.s32.totalorder 1, %s14
      %p192 = scmp.lt.s32.totalorder %s14, 3
      %p193 = pnand %p191, %p192
      %p194 = pneg %p193
      // Predicated region
      $region37: #{tpu_custom_call.1} parent=5 // pred_check
        _
      $region38: #{tpu_custom_call.1} parent=5 // pred_check_branch
        %196 = sbr.rel (%p193) target = $region40
      $region39: #{tpu_custom_call.1} parent=5 // pred_region
        %s197 = ssub.s32 %s14, 1
        %s198 = smul.u32 2, %s19
        %p199 = scmp.lt.s32.totalorder %s198, 3
        %s200 = scalar_select %p199, %s198, 3
        %s201 = smul.addr %s200, 2
        %s202 = smul.addr %s201, 4
        %s203 = scalar_lea.vmem %s0, %s202
        %p204 = pneg %p40
        %p205 = pneg %p37
        %p206 = pneg %p61
        %p207 = pneg %p58
        %p208 = pneg %p82
        %p209 = pneg %p79
        %p210 = pneg %p103
        %p211 = pneg %p100
        %p212 = pneg %p124
        %p213 = pneg %p121
        %p214 = pneg %p150
        %p215 = pneg %p147
        %s216 = sand.u32 %s137, 1
        %s217 = scalar_lea.sflag [#allocation3], %s216
        %s218 = sand.u32 %s137, 1
        %s219 = smul.addr %s218, 16
        %s220 = scalar_lea.vmem [#allocation2], %s219
        %s221 = smul.u32 2, %s19
        %p222 = scmp.lt.s32.totalorder %s221, 3
        %s223 = scalar_select %p222, %s221, 3
        %s224 = smul.addr %s223, 2
        %s225 = smul.addr %s224, 4
        %s226 = scalar_lea.vmem %s0, %s225
        %s227 = smul.u32 2, %s19
        %s228 = smul.u32 2, %s19
        %v230 = vld [vmem:[%s226] sm:$0x1]
        %v231 = vld [vmem:[%s226 + $0x8] sm:$0x1]
        %v232 = vld [vmem:[%s1] sm:$0xf]
        %v233 = vld [vmem:[%s1 + $0x4] sm:$0xf]
        %v234 = vld [vmem:[%s1 + $0x8] sm:$0xf]
        %v235 = vld [vmem:[%s1 + $0xc] sm:$0xf]
        %v238 = vunpack.c.l.b16 %v230
        %v239 = vunpack.c.l.b16 %v231
        %v240 = vpack.c.b16 %v238, %v238
        %v241 = vpack.c.b16 %v239, %v239
        %v242 = vunpack.c.l.b16 %v240
        %v243 = vunpack.c.l.b16 %v241
        %v244 = vrot.slane %v243, 7
        %vm245 = vcmask 1041409
        %v246 = vsel %vm245, %v244, %v242
        %v247 = vpack.c.b16 %v246, %v246
        %v252 = vunpack.c.l.b16 %v232
        %v253 = vunpack.c.l.b16 %v233
        %v254 = vunpack.c.l.b16 %v234
        %v255 = vunpack.c.l.b16 %v235
        %v256 = vpack.c.b16 %v253, %v252
        %v257 = vpack.c.b16 %v255, %v254
        %vm260 = vcmask 261120
        %v262 = vsel %vm260, %v247, 0
        %264 = vmatpush.bf16.msra.mxu0 0
        %265 = vmatpush.bf16.msra.mxu0 0
        %266 = vmatpush.bf16.msra.mxu0 0
        %267 = vmatpush.bf16.msra.mxu0 0
        %268 = vmatpush.bf16.msra.mxu0 0
        %269 = vmatpush.bf16.msra.mxu0 0
        %270 = vmatpush.bf16.msra.mxu0 %v257
        %271 = vmatpush.bf16.msra.mxu0 %v256
        %272 = vmatmul.bf16.gmra.mxu0 %v262
        %v273 = vpop.f32.mrf.mxu0
        %v274 = vadd.f32 0.0, %v273
        %v275 = vpop.f32.mrf.mxu0
        %276 = vdwg.mxu0
        %v277 = vld [vmem:[%s2] sm:$0xf]
        %v278 = vld [vmem:[%s2 + $0x4] sm:$0xf]
        %v279 = vld [vmem:[%s2 + $0x8] sm:$0xf]
        %v280 = vld [vmem:[%s2 + $0xc] sm:$0xf]
        %v281 = vld [vmem:[%s3] sm:$0xf]
        %v282 = vld [vmem:[%s3 + $0x4] sm:$0xf]
        %v283 = vld [vmem:[%s3 + $0x8] sm:$0xf]
        %v284 = vld [vmem:[%s3 + $0xc] sm:$0xf]
        %v285 = vld [vmem:[%s4] sm:$0x1]
        %v286 = vld [vmem:[%s226] sm:$0xf]
        %v287 = vld [vmem:[%s226 + $0x4] sm:$0x1]
        %v290 = vunpack.c.l.b16 %v286
        %v291 = vunpack.c.l.b16 %v287
        %v292 = vpack.c.b16 %v291, %v290
        %v294 = vshrl.u32 %v292, 16
        %v296 = vshll.u32 %v292, 16
        %v298 = vrot.slane %v296, 1
        %v299 = vor.u32 %v294, %v298
        %v304 = vunpack.c.l.b16 %v277
        %v305 = vunpack.c.l.b16 %v278
        %v306 = vunpack.c.l.b16 %v279
        %v307 = vunpack.c.l.b16 %v280
        %v308 = vpack.c.b16 %v305, %v304
        %v309 = vpack.c.b16 %v307, %v306
        %v313 = vsel %vm260, %v299, 0
        %315 = vmatpush.bf16.msra.mxu0 0
        %316 = vmatpush.bf16.msra.mxu0 0
        %317 = vmatpush.bf16.msra.mxu0 0
        %318 = vmatpush.bf16.msra.mxu0 0
        %319 = vmatpush.bf16.msra.mxu0 0
        %320 = vmatpush.bf16.msra.mxu0 0
        %321 = vmatpush.bf16.msra.mxu0 %v309
        %322 = vmatpush.bf16.msra.mxu0 %v308
        %323 = vmatmul.bf16.gmra.mxu0 %v313
        %v324 = vpop.f32.mrf.mxu0
        %v325 = vadd.f32 0.0, %v324
        %v326 = vpop.f32.mrf.mxu0
        %327 = vdwg.mxu0
        %v328 = vperm.slane %v274, 0
        %v329 = vmul.f32 %v325, %v328
        %v330 = vsel %vm260, %v329, 0.0
        %331 = vadd.xlane.f32.xlu0 %v330
        %v332 = vpop.xlane.xlu0 %331
        %v333 = vrot.slane %v332, 4
        %v334 = vmax.f32 %v332, %v333
        %v335 = vrot.slane %v334, 2
        %v336 = vmax.f32 %v334, %v335
        %v337 = vrot.slane %v336, 1
        %v338 = vmax.f32 %v336, %v337
        %v339 = vsub.f32 %v332, %v338
        %v340 = vmul.f32 %v339, 1.442695
        %v341 = vpow.pop %v340
        %v342 = vrot.slane %v341, 4
        %v343 = vadd.f32 %v341, %v342
        %v344 = vrot.slane %v343, 2
        %v345 = vadd.f32 %v343, %v344
        %v346 = vrot.slane %v345, 1
        %v347 = vadd.f32 %v345, %v346
        %v348 = vrcp.pop %v347
        %v349 = vmul.f32 %v341, %v348
        %v350 = vmul.f32 %v325, %v349
        %v351 = vpack.c.bf16 %v350, %v350
        %v352 = vunpack.c.l.bf16 %v285
        %v353 = vperm.slane %v352, 0
        %355 = vrot.lane.b32.xlu0 %v351, 96
        %v356 = vpop.permute.xlu0 %355
        %v361 = vunpack.c.l.b16 %v281
        %v362 = vunpack.c.l.b16 %v282
        %v363 = vunpack.c.l.b16 %v283
        %v364 = vunpack.c.l.b16 %v284
        %v365 = vpack.c.b16 %v362, %v361
        %v366 = vpack.c.b16 %v364, %v363
        %v370 = vsel %vm260, %v356, 0
        %372 = vmatpush.bf16.msra.mxu0 0
        %373 = vmatpush.bf16.msra.mxu0 0
        %374 = vmatpush.bf16.msra.mxu0 0
        %375 = vmatpush.bf16.msra.mxu0 0
        %376 = vmatpush.bf16.msra.mxu0 0
        %377 = vmatpush.bf16.msra.mxu0 0
        %378 = vmatpush.bf16.msra.mxu0 %v366
        %379 = vmatpush.bf16.msra.mxu0 %v365
        %380 = vmatmul.bf16.gmra.mxu0 %v370
        %v381 = vpop.f32.mrf.mxu0
        %v382 = vadd.f32 %v353, %v381
        %v383 = vpop.f32.mrf.mxu0
        %384 = vdwg.mxu0
        %385 = vst.msk [vmem:[%s220] sm:$0xff] %vm260, %v382
        %s386 = scalar_lea.vmem %s226, 8
        %v387 = vld [vmem:[%s386] sm:$0xf]
        %v388 = vld [vmem:[%s386 + $0x4] sm:$0x1]
        %v391 = vunpack.c.l.b16 %v387
        %v392 = vunpack.c.l.b16 %v388
        %v393 = vpack.c.b16 %v392, %v391
        %v395 = vshrl.u32 %v393, 16
        %v397 = vshll.u32 %v393, 16
        %v399 = vrot.slane %v397, 1
        %v400 = vor.u32 %v395, %v399
        %v402 = vsel %vm260, %v400, 0
        %404 = vmatpush.bf16.msra.mxu0 0
        %405 = vmatpush.bf16.msra.mxu0 0
        %406 = vmatpush.bf16.msra.mxu0 0
        %407 = vmatpush.bf16.msra.mxu0 0
        %408 = vmatpush.bf16.msra.mxu0 0
        %409 = vmatpush.bf16.msra.mxu0 0
        %410 = vmatpush.bf16.msra.mxu0 %v309
        %411 = vmatpush.bf16.msra.mxu0 %v308
        %412 = vmatmul.bf16.gmra.mxu0 %v402
        %v413 = vpop.f32.mrf.mxu0
        %v414 = vadd.f32 0.0, %v413
        %v415 = vpop.f32.mrf.mxu0
        %416 = vdwg.mxu0
        %v417 = vperm.slane %v274, 1
        %v418 = vmul.f32 %v414, %v417
        %v419 = vsel %vm260, %v418, 0.0
        %420 = vadd.xlane.f32.xlu0 %v419
        %v421 = vpop.xlane.xlu0 %420
        %v422 = vrot.slane %v421, 4
        %v423 = vmax.f32 %v421, %v422
        %v424 = vrot.slane %v423, 2
        %v425 = vmax.f32 %v423, %v424
        %v426 = vrot.slane %v425, 1
        %v427 = vmax.f32 %v425, %v426
        %v428 = vsub.f32 %v421, %v427
        %v429 = vmul.f32 %v428, 1.442695
        %v430 = vpow.pop %v429
        %v431 = vrot.slane %v430, 4
        %v432 = vadd.f32 %v430, %v431
        %v433 = vrot.slane %v432, 2
        %v434 = vadd.f32 %v432, %v433
        %v435 = vrot.slane %v434, 1
        %v436 = vadd.f32 %v434, %v435
        %v437 = vrcp.pop %v436
        %v438 = vmul.f32 %v430, %v437
        %v439 = vmul.f32 %v414, %v438
        %v440 = vpack.c.bf16 %v439, %v439
        %442 = vrot.lane.b32.xlu0 %v440, 96
        %v443 = vpop.permute.xlu0 %442
        %v445 = vsel %vm260, %v443, 0
        %447 = vmatpush.bf16.msra.mxu0 0
        %448 = vmatpush.bf16.msra.mxu0 0
        %449 = vmatpush.bf16.msra.mxu0 0
        %450 = vmatpush.bf16.msra.mxu0 0
        %451 = vmatpush.bf16.msra.mxu0 0
        %452 = vmatpush.bf16.msra.mxu0 0
        %453 = vmatpush.bf16.msra.mxu0 %v366
        %454 = vmatpush.bf16.msra.mxu0 %v365
        %455 = vmatmul.bf16.gmra.mxu0 %v445
        %v456 = vpop.f32.mrf.mxu0
        %v457 = vadd.f32 %v353, %v456
        %v458 = vpop.f32.mrf.mxu0
        %459 = vdwg.mxu0
        %s460 = scalar_lea.vmem %s220, 8 [#allocation2]
        %461 = vst.msk [vmem:[%s460] sm:$0xff] %vm260, %v457
        %s462 = sand.u32 %s137, 1
        %s463 = scalar_lea.sflag [#allocation3], %s462
        %s464 = sand.u32 %s137, 1
        %s465 = smul.addr %s464, 16
        %s466 = scalar_lea.vmem [#allocation2], %s465
        // Predicated region
        $region41: #{tpu_custom_call.1} parent=39 // pred_check
          %p467 = pneg %p147
        $region42: #{tpu_custom_call.1} parent=39 // pred_check_branch
          %469 = sbr.rel (%p467) target = $region44
        $region43: #{tpu_custom_call.1} parent=39 // pred_region
          %s470 = smul.u32 2, %s19
          %472 = vsyncadd %s463, 0
          %s473 = smul.addr %s470, 8
          %s474 = scalar_lea.hbm %s5, %s473
          %s475 = sshll.u32 %s466, 4
          %s476 = int_to_ptr.vmem [resolvable:$true] %s475
          %s477 = sshll.u32 %s474, 4
          %s478 = int_to_ptr.hbm [resolvable:$true] %s477
          %483 = dma.vmem_to_hbm [thread:$0]  %s476, 256, %s478, %s463, 128, 128, 8
        $region44: #{tpu_custom_call.1} parent=39 // pred_fallthru
          _
      $region40: #{tpu_custom_call.1} parent=5 // pred_fallthru
        _
      %p484 = scmp.le.s32.totalorder 2, %s14
      // Predicated region
      $region45: #{tpu_custom_call.1} parent=5 // pred_check
        %p485 = pneg %p484
      $region46: #{tpu_custom_call.1} parent=5 // pred_check_branch
        %487 = sbr.rel (%p485) target = $region48
      $region47: #{tpu_custom_call.1} parent=5 // pred_region
        %s488 = ssub.s32 %s14, 2
        // Predicated region
        $region49: #{tpu_custom_call.1} parent=47 // pred_check
          %p489 = pneg %p153
        $region50: #{tpu_custom_call.1} parent=47 // pred_check_branch
          %491 = sbr.rel (%p489) target = $region52
        $region51: #{tpu_custom_call.1} parent=47 // pred_region
          %s492 = sand.u32 %s138, 1
          %s493 = scalar_lea.sflag [#allocation3], %s492
          %s494 = sand.u32 %s138, 1
          %s495 = smul.addr %s494, 16
          %s496 = scalar_lea.vmem [#allocation2], %s495
          %498 = dma.done %s493, 256
        $region52: #{tpu_custom_call.1} parent=47 // pred_fallthru
          _
      $region48: #{tpu_custom_call.1} parent=5 // pred_fallthru
        _
    $region6: #{tpu_custom_call.1} parent=1 // loop_footer
      %s18 = sadd.s32 1, %s14
    $region7: #{tpu_custom_call.1} parent=1 // loop_footer_branch
      %13 = sbr.rel target = $region3
    $region8: #{tpu_custom_call.1} parent=1 // loop_exit
      _
    %499 = vsyncpa [#allocation3], 1
    %s500 = scalar_lea.sflag [#allocation3], 1
    %501 = vsyncpa %s500, 1

// kernel: tpu_custom_call.1
$region0: #{tpu_custom_call.1}
  #allocation0 [shape = 'u32[]', space=smem, size = 0x4, offset = 0x4, fixed_abs, tag = 'smem constant byte address 0x4 - core index']
  #allocation1 [shape = 'u32[72,128]{1,0:T(1,128)}', space=vmem, size = 0x9000, scoped, tag = 'internal scratch']
  %s0 = inlined_call_operand.vmem [shape: bf16[4,9,32], index: 0, kind: input, shape index: {}]
  %s1 = inlined_call_operand.vmem [shape: bf16[32,32], index: 1, kind: input, shape index: {}]
  %s2 = inlined_call_operand.vmem [shape: bf16[32,64], index: 2, kind: input, shape index: {}]
  %s3 = inlined_call_operand.vmem [shape: bf16[32,32], index: 3, kind: input, shape index: {}]
  %s4 = inlined_call_operand.vmem [shape: bf16[1,32], index: 4, kind: input, shape index: {}]
  %s5 = inlined_call_operand.hbm [shape: f32[4,8,32], index: 5, kind: output, shape index: {}]
  %s6 = sld [smem:[#allocation0]]
  $region53: #{tpu_custom_call.1} parent=0
    _
  %s8 = ssub.s32 1, %s6
  %s9 = scalar_select 0, %s8, %s6
  $region1: #{tpu_custom_call.1} parent=0
    #allocation2 [shape = 'u8[16384]{0}', space=vmem, size = 0x4000, scoped, tag = 'output window, operand 0']
    #allocation3 [shape = 's32[2]{0}', space=sflag, size = 0x8, scoped, tag = 'scoped memory for tpu_custom_call.1']
    %10 = vsyncpa [#allocation3], 0
    %s11 = scalar_lea.sflag [#allocation3], 1
    %12 = vsyncpa %s11, 0
    loop: start=0, step=1, limit=4
    $region2: #{tpu_custom_call.1} parent=1 // loop_pre_header
      _
    $region3: #{tpu_custom_call.1} parent=1 // loop_header
      %s14 = sphi 0, %s18
      %p15 = scmp.ge.s32.totalorder %s14, 4
      %s24 = sphi 0, %s26
      %s27 = sphi 0, %s24
      %s28 = sphi 0, %s27
      %s44 = sphi 0, %s28
      %s48 = sphi 0, %s48
      %s50 = sphi 0, %s48
      %s51 = sphi 0, %s50
      %s65 = sphi 0, %s51
      %s69 = sphi 0, %s69
      %s71 = sphi 0, %s69
      %s72 = sphi 0, %s71
      %s86 = sphi 0, %s72
      %s90 = sphi 0, %s90
      %s92 = sphi 0, %s90
      %s93 = sphi 0, %s92
      %s107 = sphi 0, %s93
      %s111 = sphi 0, %s111
      %s113 = sphi 0, %s111
      %s114 = sphi 0, %s113
      %s128 = sphi 0, %s114
      %s134 = sphi 0, %s136
      %s137 = sphi 0, %s134
      %s138 = sphi 0, %s137
      %s154 = sphi 0, %s138
    $region4: #{tpu_custom_call.1} parent=1 // loop_header_branch
      %17 = sbr.rel (%p15) target = $region8
    $region5: #{tpu_custom_call.1} parent=1 // loop_body
      %s19 = ssub.s32 %s14, 1
      %s20 = ssub.s32 %s14, 2
      %s21 = sadd.s32 %s14, 1
      %s22 = ssub.s32 %s14, %s21
      %p23 = scmp.eq.s32.totalorder %s22, 0
      %s25 = sadd.s32 %s24, 1
      %s26 = scalar_select %p23, %s24, %s25
      %p29 = pneg %p23
      %p30 = scmp.eq.s32.totalorder %s14, 1
      %p31 = por %p29, %p30
      %p32 = scmp.ne.s32.totalorder %s24, %s27
      %p33 = scmp.eq.s32.totalorder %s14, 0
      %p34 = por %p32, %p33
      %p35 = scmp.ne.s32.totalorder %s24, %s27
      %p36 = scmp.eq.s32.totalorder %s19, 1
      %p37 = por %p35, %p36
      %p38 = scmp.ne.s32.totalorder %s27, %s28
      %p39 = scmp.eq.s32.totalorder %s19, 0
      %p40 = por %p38, %p39
      %p41 = scmp.ne.s32.totalorder %s27, %s28
      %p42 = scmp.eq.s32.totalorder %s20, 1
      %p43 = por %p41, %p42
      %p45 = scmp.ne.s32.totalorder %s28, %s44
      %p46 = scmp.eq.s32.totalorder %s20, 0
      %p47 = por %p45, %p46
      %s49 = sadd.s32 %s48, 1
      %p52 = scmp.eq.s32.totalorder %s14, 1
      %p53 = scmp.ne.s32.totalorder %s48, %s50
      %p54 = scmp.eq.s32.totalorder %s14, 0
      %p55 = por %p53, %p54
      %p56 = scmp.ne.s32.totalorder %s48, %s50
      %p57 = scmp.eq.s32.totalorder %s19, 1
      %p58 = por %p56, %p57
      %p59 = scmp.ne.s32.totalorder %s50, %s51
      %p60 = scmp.eq.s32.totalorder %s19, 0
      %p61 = por %p59, %p60
      %p62 = scmp.ne.s32.totalorder %s50, %s51
      %p63 = scmp.eq.s32.totalorder %s20, 1
      %p64 = por %p62, %p63
      %p66 = scmp.ne.s32.totalorder %s51, %s65
      %p67 = scmp.eq.s32.totalorder %s20, 0
      %p68 = por %p66, %p67
      %s70 = sadd.s32 %s69, 1
      %p73 = scmp.eq.s32.totalorder %s14, 1
      %p74 = scmp.ne.s32.totalorder %s69, %s71
      %p75 = scmp.eq.s32.totalorder %s14, 0
      %p76 = por %p74, %p75
      %p77 = scmp.ne.s32.totalorder %s69, %s71
      %p78 = scmp.eq.s32.totalorder %s19, 1
      %p79 = por %p77, %p78
      %p80 = scmp.ne.s32.totalorder %s71, %s72
      %p81 = scmp.eq.s32.totalorder %s19, 0
      %p82 = por %p80, %p81
      %p83 = scmp.ne.s32.totalorder %s71, %s72
      %p84 = scmp.eq.s32.totalorder %s20, 1
      %p85 = por %p83, %p84
      %p87 = scmp.ne.s32.totalorder %s72, %s86
      %p88 = scmp.eq.s32.totalorder %s20, 0
      %p89 = por %p87, %p88
      %s91 = sadd.s32 %s90, 1
      %p94 = scmp.eq.s32.totalorder %s14, 1
      %p95 = scmp.ne.s32.totalorder %s90, %s92
      %p96 = scmp.eq.s32.totalorder %s14, 0
      %p97 = por %p95, %p96
      %p98 = scmp.ne.s32.totalorder %s90, %s92
      %p99 = scmp.eq.s32.totalorder %s19, 1
      %p100 = por %p98, %p99
      %p101 = scmp.ne.s32.totalorder %s92, %s93
      %p102 = scmp.eq.s32.totalorder %s19, 0
      %p103 = por %p101, %p102
      %p104 = scmp.ne.s32.totalorder %s92, %s93
      %p105 = scmp.eq.s32.totalorder %s20, 1
      %p106 = por %p104, %p105
      %p108 = scmp.ne.s32.totalorder %s93, %s107
      %p109 = scmp.eq.s32.totalorder %s20, 0
      %p110 = por %p108, %p109
      %s112 = sadd.s32 %s111, 1
      %p115 = scmp.eq.s32.totalorder %s14, 1
      %p116 = scmp.ne.s32.totalorder %s111, %s113
      %p117 = scmp.eq.s32.totalorder %s14, 0
      %p118 = por %p116, %p117
      %p119 = scmp.ne.s32.totalorder %s111, %s113
      %p120 = scmp.eq.s32.totalorder %s19, 1
      %p121 = por %p119, %p120
      %p122 = scmp.ne.s32.totalorder %s113, %s114
      %p123 = scmp.eq.s32.totalorder %s19, 0
      %p124 = por %p122, %p123
      %p125 = scmp.ne.s32.totalorder %s113, %s114
      %p126 = scmp.eq.s32.totalorder %s20, 1
      %p127 = por %p125, %p126
      %p129 = scmp.ne.s32.totalorder %s114, %s128
      %p130 = scmp.eq.s32.totalorder %s20, 0
      %p131 = por %p129, %p130
      %s132 = ssub.s32 %s14, %s21
      %p133 = scmp.eq.s32.totalorder %s132, 0
      %s135 = sadd.s32 %s134, 1
      %s136 = scalar_select %p133, %s134, %s135
      %p139 = pneg %p133
      %p140 = scmp.eq.s32.totalorder %s14, 1
      %p141 = por %p139, %p140
      %p142 = scmp.ne.s32.totalorder %s134, %s137
      %p143 = scmp.eq.s32.totalorder %s14, 0
      %p144 = por %p142, %p143
      %p145 = scmp.ne.s32.totalorder %s134, %s137
      %p146 = scmp.eq.s32.totalorder %s19, 1
      %p147 = por %p145, %p146
      %p148 = scmp.ne.s32.totalorder %s137, %s138
      %p149 = scmp.eq.s32.totalorder %s19, 0
      %p150 = por %p148, %p149
      %p151 = scmp.ne.s32.totalorder %s137, %s138
      %p152 = scmp.eq.s32.totalorder %s20, 1
      %p153 = por %p151, %p152
      %p155 = scmp.ne.s32.totalorder %s138, %s154
      %p156 = scmp.eq.s32.totalorder %s20, 0
      %p157 = por %p155, %p156
      %p158 = scmp.le.s32.totalorder 1, %s14
      %p159 = scmp.lt.s32.totalorder %s14, 3
      %p160 = pnand %p158, %p159
      %p161 = pneg %p160
      // Predicated region
      $region9: #{tpu_custom_call.1} parent=5 // pred_check
        _
      $region10: #{tpu_custom_call.1} parent=5 // pred_check_branch
        %163 = sbr.rel (%p160) target = $region12
      $region11: #{tpu_custom_call.1} parent=5 // pred_region
        %s164 = ssub.s32 %s14, 1
        // Predicated region
        $region13: #{tpu_custom_call.1} parent=11 // pred_check
          %p165 = pneg %p61
        $region14: #{tpu_custom_call.1} parent=11 // pred_check_branch
          %167 = sbr.rel (%p165) target = $region16
        $region15: #{tpu_custom_call.1} parent=11 // pred_region
          _
        $region16: #{tpu_custom_call.1} parent=11 // pred_fallthru
          _
        // Predicated region
        $region17: #{tpu_custom_call.1} parent=11 // pred_check
          %p168 = pneg %p82
        $region18: #{tpu_custom_call.1} parent=11 // pred_check_branch
          %170 = sbr.rel (%p168) target = $region20
        $region19: #{tpu_custom_call.1} parent=11 // pred_region
          _
        $region20: #{tpu_custom_call.1} parent=11 // pred_fallthru
          _
        // Predicated region
        $region21: #{tpu_custom_call.1} parent=11 // pred_check
          %p171 = pneg %p103
        $region22: #{tpu_custom_call.1} parent=11 // pred_check_branch
          %173 = sbr.rel (%p171) target = $region24
        $region23: #{tpu_custom_call.1} parent=11 // pred_region
          _
        $region24: #{tpu_custom_call.1} parent=11 // pred_fallthru
          _
        // Predicated region
        $region25: #{tpu_custom_call.1} parent=11 // pred_check
          %p174 = pneg %p124
        $region26: #{tpu_custom_call.1} parent=11 // pred_check_branch
          %176 = sbr.rel (%p174) target = $region28
        $region27: #{tpu_custom_call.1} parent=11 // pred_region
          _
        $region28: #{tpu_custom_call.1} parent=11 // pred_fallthru
          _
      $region12: #{tpu_custom_call.1} parent=5 // pred_fallthru
        _
      %p177 = scmp.lt.s32.totalorder %s14, 2
      // Predicated region
      $region29: #{tpu_custom_call.1} parent=5 // pred_check
        %p178 = pneg %p177
      $region30: #{tpu_custom_call.1} parent=5 // pred_check_branch
        %180 = sbr.rel (%p178) target = $region32
      $region31: #{tpu_custom_call.1} parent=5 // pred_region
        // Predicated region
        $region33: #{tpu_custom_call.1} parent=31 // pred_check
          %p181 = pneg %p34
        $region34: #{tpu_custom_call.1} parent=31 // pred_check_branch
          %183 = sbr.rel (%p181) target = $region36
        $region35: #{tpu_custom_call.1} parent=31 // pred_region
          %s184 = smul.u32 2, %s14
          %p185 = scmp.lt.s32.totalorder %s184, 3
          %s186 = scalar_select %p185, %s184, 3
          %s187 = smul.addr %s186, 2
          %s188 = smul.addr %s187, 4
          %s189 = scalar_lea.vmem %s0, %s188
          %s190 = smul.u32 2, %s14
        $region36: #{tpu_custom_call.1} parent=31 // pred_fallthru
          _
      $region32: #{tpu_custom_call.1} parent=5 // pred_fallthru
        _
      %p191 = scmp.le.s32.totalorder 1, %s14
      %p192 = scmp.lt.s32.totalorder %s14, 3
      %p193 = pnand %p191, %p192
      %p194 = pneg %p193
      // Predicated region
      $region37: #{tpu_custom_call.1} parent=5 // pred_check
        _
      $region38: #{tpu_custom_call.1} parent=5 // pred_check_branch
        %196 = sbr.rel (%p193) target = $region40
      $region39: #{tpu_custom_call.1} parent=5 // pred_region
        %s197 = ssub.s32 %s14, 1
        %s198 = smul.u32 2, %s19
        %p199 = scmp.lt.s32.totalorder %s198, 3
        %s200 = scalar_select %p199, %s198, 3
        %s201 = smul.addr %s200, 2
        %s202 = smul.addr %s201, 4
        %s203 = scalar_lea.vmem %s0, %s202
        %p204 = pneg %p40
        %p205 = pneg %p37
        %p206 = pneg %p61
        %p207 = pneg %p58
        %p208 = pneg %p82
        %p209 = pneg %p79
        %p210 = pneg %p103
        %p211 = pneg %p100
        %p212 = pneg %p124
        %p213 = pneg %p121
        %p214 = pneg %p150
        %p215 = pneg %p147
        %s216 = sand.u32 %s137, 1
        %s217 = scalar_lea.sflag [#allocation3], %s216
        %s218 = sand.u32 %s137, 1
        %s219 = smul.addr %s218, 16
        %s220 = scalar_lea.vmem [#allocation2], %s219
        %s221 = smul.u32 2, %s19
        %p222 = scmp.lt.s32.totalorder %s221, 3
        %s223 = scalar_select %p222, %s221, 3
        %s224 = smul.addr %s223, 2
        %s225 = smul.addr %s224, 4
        %s226 = scalar_lea.vmem %s0, %s225
        %s227 = smul.u32 2, %s19
        %s228 = smul.u32 2, %s19
        %v230 = vld [vmem:[%s226] sm:$0x1]
        %v231 = vld [vmem:[%s226 + $0x8] sm:$0x1]
        %v232 = vld [vmem:[%s1] sm:$0xf]
        %v233 = vld [vmem:[%s1 + $0x4] sm:$0xf]
        %v234 = vld [vmem:[%s1 + $0x8] sm:$0xf]
        %v235 = vld [vmem:[%s1 + $0xc] sm:$0xf]
        %v238 = vunpack.c.l.b16 %v230
        %v239 = vunpack.c.l.b16 %v231
        %v240 = vpack.c.b16 %v238, %v238
        %v241 = vpack.c.b16 %v239, %v239
        %v242 = vunpack.c.l.b16 %v240
        %v243 = vunpack.c.l.b16 %v241
        %v244 = vrot.slane %v243, 7
        %vm245 = vcmask 1041409
        %v246 = vsel %vm245, %v244, %v242
        %v247 = vpack.c.b16 %v246, %v246
        %v252 = vunpack.c.l.b16 %v232
        %v253 = vunpack.c.l.b16 %v233
        %v254 = vunpack.c.l.b16 %v234
        %v255 = vunpack.c.l.b16 %v235
        %v256 = vpack.c.b16 %v253, %v252
        %v257 = vpack.c.b16 %v255, %v254
        %vm260 = vcmask 261120
        %v262 = vsel %vm260, %v247, 0
        %264 = vmatpush.bf16.msra.mxu0 0
        %265 = vmatpush.bf16.msra.mxu0 0
        %266 = vmatpush.bf16.msra.mxu0 0
        %267 = vmatpush.bf16.msra.mxu0 0
        %268 = vmatpush.bf16.msra.mxu0 0
        %269 = vmatpush.bf16.msra.mxu0 0
        %270 = vmatpush.bf16.msra.mxu0 %v257
        %271 = vmatpush.bf16.msra.mxu0 %v256
        %272 = vmatmul.bf16.gmra.mxu0 %v262
        %v273 = vpop.f32.mrf.mxu0
        %v274 = vadd.f32 0.0, %v273
        %v275 = vpop.f32.mrf.mxu0
        %276 = vdwg.mxu0
        %v277 = vld [vmem:[%s2] sm:$0xf]
        %v278 = vld [vmem:[%s2 + $0x4] sm:$0xf]
        %v279 = vld [vmem:[%s2 + $0x8] sm:$0xf]
        %v280 = vld [vmem:[%s2 + $0xc] sm:$0xf]
        %v281 = vld [vmem:[%s3] sm:$0xf]
        %v282 = vld [vmem:[%s3 + $0x4] sm:$0xf]
        %v283 = vld [vmem:[%s3 + $0x8] sm:$0xf]
        %v284 = vld [vmem:[%s3 + $0xc] sm:$0xf]
        %v285 = vld [vmem:[%s4] sm:$0x1]
        %v286 = vld [vmem:[%s226] sm:$0xf]
        %v287 = vld [vmem:[%s226 + $0x4] sm:$0x1]
        %v290 = vunpack.c.l.b16 %v286
        %v291 = vunpack.c.l.b16 %v287
        %v292 = vpack.c.b16 %v291, %v290
        %v294 = vshrl.u32 %v292, 16
        %v296 = vshll.u32 %v292, 16
        %v298 = vrot.slane %v296, 1
        %v299 = vor.u32 %v294, %v298
        %v304 = vunpack.c.l.b16 %v277
        %v305 = vunpack.c.l.b16 %v278
        %v306 = vunpack.c.l.b16 %v279
        %v307 = vunpack.c.l.b16 %v280
        %v308 = vpack.c.b16 %v305, %v304
        %v309 = vpack.c.b16 %v307, %v306
        %v313 = vsel %vm260, %v299, 0
        %315 = vmatpush.bf16.msra.mxu0 0
        %316 = vmatpush.bf16.msra.mxu0 0
        %317 = vmatpush.bf16.msra.mxu0 0
        %318 = vmatpush.bf16.msra.mxu0 0
        %319 = vmatpush.bf16.msra.mxu0 0
        %320 = vmatpush.bf16.msra.mxu0 0
        %321 = vmatpush.bf16.msra.mxu0 %v309
        %322 = vmatpush.bf16.msra.mxu0 %v308
        %323 = vmatmul.bf16.gmra.mxu0 %v313
        %v324 = vpop.f32.mrf.mxu0
        %v325 = vadd.f32 0.0, %v324
        %v326 = vpop.f32.mrf.mxu0
        %327 = vdwg.mxu0
        %v328 = vperm.slane %v274, 0
        %v329 = vmul.f32 %v325, %v328
        %v330 = vsel %vm260, %v329, 0.0
        %331 = vadd.xlane.f32.xlu0 %v330
        %v332 = vpop.xlane.xlu0 %331
        %v333 = vrot.slane %v332, 4
        %v334 = vmax.f32 %v332, %v333
        %v335 = vrot.slane %v334, 2
        %v336 = vmax.f32 %v334, %v335
        %v337 = vrot.slane %v336, 1
        %v338 = vmax.f32 %v336, %v337
        %v339 = vsub.f32 %v332, %v338
        %v340 = vmul.f32 %v339, 1.442695
        %v341 = vpow.pop %v340
        %v342 = vrot.slane %v341, 4
        %v343 = vadd.f32 %v341, %v342
        %v344 = vrot.slane %v343, 2
        %v345 = vadd.f32 %v343, %v344
        %v346 = vrot.slane %v345, 1
        %v347 = vadd.f32 %v345, %v346
        %v348 = vrcp.pop %v347
        %v349 = vmul.f32 %v341, %v348
        %v350 = vmul.f32 %v325, %v349
        %v351 = vpack.c.bf16 %v350, %v350
        %v352 = vunpack.c.l.bf16 %v285
        %v353 = vperm.slane %v352, 0
        %355 = vrot.lane.b32.xlu0 %v351, 96
        %v356 = vpop.permute.xlu0 %355
        %v361 = vunpack.c.l.b16 %v281
        %v362 = vunpack.c.l.b16 %v282
        %v363 = vunpack.c.l.b16 %v283
        %v364 = vunpack.c.l.b16 %v284
        %v365 = vpack.c.b16 %v362, %v361
        %v366 = vpack.c.b16 %v364, %v363
        %v370 = vsel %vm260, %v356, 0
        %372 = vmatpush.bf16.msra.mxu0 0
        %373 = vmatpush.bf16.msra.mxu0 0
        %374 = vmatpush.bf16.msra.mxu0 0
        %375 = vmatpush.bf16.msra.mxu0 0
        %376 = vmatpush.bf16.msra.mxu0 0
        %377 = vmatpush.bf16.msra.mxu0 0
        %378 = vmatpush.bf16.msra.mxu0 %v366
        %379 = vmatpush.bf16.msra.mxu0 %v365
        %380 = vmatmul.bf16.gmra.mxu0 %v370
        %v381 = vpop.f32.mrf.mxu0
        %v382 = vadd.f32 %v353, %v381
        %v383 = vpop.f32.mrf.mxu0
        %384 = vdwg.mxu0
        %385 = vst.msk [vmem:[%s220] sm:$0xff] %vm260, %v382
        %s386 = scalar_lea.vmem %s226, 8
        %v387 = vld [vmem:[%s386] sm:$0xf]
        %v388 = vld [vmem:[%s386 + $0x4] sm:$0x1]
        %v391 = vunpack.c.l.b16 %v387
        %v392 = vunpack.c.l.b16 %v388
        %v393 = vpack.c.b16 %v392, %v391
        %v395 = vshrl.u32 %v393, 16
        %v397 = vshll.u32 %v393, 16
        %v399 = vrot.slane %v397, 1
        %v400 = vor.u32 %v395, %v399
        %v402 = vsel %vm260, %v400, 0
        %404 = vmatpush.bf16.msra.mxu0 0
        %405 = vmatpush.bf16.msra.mxu0 0
        %406 = vmatpush.bf16.msra.mxu0 0
        %407 = vmatpush.bf16.msra.mxu0 0
        %408 = vmatpush.bf16.msra.mxu0 0
        %409 = vmatpush.bf16.msra.mxu0 0
        %410 = vmatpush.bf16.msra.mxu0 %v309
        %411 = vmatpush.bf16.msra.mxu0 %v308
        %412 = vmatmul.bf16.gmra.mxu0 %v402
        %v413 = vpop.f32.mrf.mxu0
        %v414 = vadd.f32 0.0, %v413
        %v415 = vpop.f32.mrf.mxu0
        %416 = vdwg.mxu0
        %v417 = vperm.slane %v274, 1
        %v418 = vmul.f32 %v414, %v417
        %v419 = vsel %vm260, %v418, 0.0
        %420 = vadd.xlane.f32.xlu0 %v419
        %v421 = vpop.xlane.xlu0 %420
        %v422 = vrot.slane %v421, 4
        %v423 = vmax.f32 %v421, %v422
        %v424 = vrot.slane %v423, 2
        %v425 = vmax.f32 %v423, %v424
        %v426 = vrot.slane %v425, 1
        %v427 = vmax.f32 %v425, %v426
        %v428 = vsub.f32 %v421, %v427
        %v429 = vmul.f32 %v428, 1.442695
        %v430 = vpow.pop %v429
        %v431 = vrot.slane %v430, 4
        %v432 = vadd.f32 %v430, %v431
        %v433 = vrot.slane %v432, 2
        %v434 = vadd.f32 %v432, %v433
        %v435 = vrot.slane %v434, 1
        %v436 = vadd.f32 %v434, %v435
        %v437 = vrcp.pop %v436
        %v438 = vmul.f32 %v430, %v437
        %v439 = vmul.f32 %v414, %v438
        %v440 = vpack.c.bf16 %v439, %v439
        %442 = vrot.lane.b32.xlu0 %v440, 96
        %v443 = vpop.permute.xlu0 %442
        %v445 = vsel %vm260, %v443, 0
        %447 = vmatpush.bf16.msra.mxu0 0
        %448 = vmatpush.bf16.msra.mxu0 0
        %449 = vmatpush.bf16.msra.mxu0 0
        %450 = vmatpush.bf16.msra.mxu0 0
        %451 = vmatpush.bf16.msra.mxu0 0
        %452 = vmatpush.bf16.msra.mxu0 0
        %453 = vmatpush.bf16.msra.mxu0 %v366
        %454 = vmatpush.bf16.msra.mxu0 %v365
        %455 = vmatmul.bf16.gmra.mxu0 %v445
        %v456 = vpop.f32.mrf.mxu0
        %v457 = vadd.f32 %v353, %v456
        %v458 = vpop.f32.mrf.mxu0
        %459 = vdwg.mxu0
        %s460 = scalar_lea.vmem %s220, 8 [#allocation2]
        %461 = vst.msk [vmem:[%s460] sm:$0xff] %vm260, %v457
        %s462 = sand.u32 %s137, 1
        %s463 = scalar_lea.sflag [#allocation3], %s462
        %s464 = sand.u32 %s137, 1
        %s465 = smul.addr %s464, 16
        %s466 = scalar_lea.vmem [#allocation2], %s465
        // Predicated region
        $region41: #{tpu_custom_call.1} parent=39 // pred_check
          %p467 = pneg %p147
        $region42: #{tpu_custom_call.1} parent=39 // pred_check_branch
          %469 = sbr.rel (%p467) target = $region44
        $region43: #{tpu_custom_call.1} parent=39 // pred_region
          %s470 = smul.u32 2, %s19
          %472 = vsyncadd %s463, 0
          %s473 = smul.addr %s470, 8
          %s474 = scalar_lea.hbm %s5, %s473
          %s475 = sshll.u32 %s466, 4
          %s476 = int_to_ptr.vmem [resolvable:$true] %s475
          %s477 = sshll.u32 %s474, 4
          %s478 = int_to_ptr.hbm [resolvable:$true] %s477
          %483 = dma.vmem_to_hbm [thread:$0]  %s476, 256, %s478, %s463, 128, 128, 8
        $region44: #{tpu_custom_call.1} parent=39 // pred_fallthru
          _
      $region40: #{tpu_custom_call.1} parent=5 // pred_fallthru
        _
      %p484 = scmp.le.s32.totalorder 2, %s14
      // Predicated region
      $region45: #{tpu_custom_call.1} parent=5 // pred_check
        %p485 = pneg %p484
      $region46: #{tpu_custom_call.1} parent=5 // pred_check_branch
        %487 = sbr.rel (%p485) target = $region48
      $region47: #{tpu_custom_call.1} parent=5 // pred_region
        %s488 = ssub.s32 %s14, 2
        // Predicated region
        $region49: #{tpu_custom_call.1} parent=47 // pred_check
          %p489 = pneg %p153
        $region50: #{tpu_custom_call.1} parent=47 // pred_check_branch
          %491 = sbr.rel (%p489) target = $region52
        $region51: #{tpu_custom_call.1} parent=47 // pred_region
          %s492 = sand.u32 %s138, 1
          %s493 = scalar_lea.sflag [#allocation3], %s492
          %s494 = sand.u32 %s138, 1
          %s495 = smul.addr %s494, 16
          %s496 = scalar_lea.vmem [#allocation2], %s495
          %498 = dma.done %s493, 256
        $region52: #{tpu_custom_call.1} parent=47 // pred_fallthru
          _
      $region48: #{tpu_custom_call.1} parent=5 // pred_fallthru
        _
    $region6: #{tpu_custom_call.1} parent=1 // loop_footer
      %s18 = sadd.s32 1, %s14
    $region7: #{tpu_custom_call.1} parent=1 // loop_footer_branch
      %13 = sbr.rel target = $region3
    $region8: #{tpu_custom_call.1} parent=1 // loop_exit
      _
    %499 = vsyncpa [#allocation3], 1
    %s500 = scalar_lea.sflag [#allocation3], 1
    %501 = vsyncpa %s500, 1

</llo_original>
